<compile_context>
chip_gen: v6e
topology: v6e:2x2x1
jax: 0.10.0
libtpu: 0.0.40
codegen_flags: <defaults>
</compile_context>

<pallas_src>
import functools

import jax
import jax.numpy as jnp
from jax.experimental import pallas as pl
from jax.experimental.pallas import tpu as pltpu

_LN_EPS = 1e-5
_LANE = 128


def _round_up(x, m):
    return (x + m - 1) // m * m


# ----------------------------------------------------------------------------
# Fused kernel: both branches of Decoder_re on one batch tile per grid step
# ----------------------------------------------------------------------------
def _fused_decoder_kernel(z_ref, w_ref, b_ref, g_ref, beta_ref, hw_ref, hb_ref,
                          reg_ref, cls_ref, *, num_layers, valid_width):
    # z_ref    : [bt, Dpad]           latent (f32, zero-padded features)
    # w_ref    : [2, L, Dpad, Dpad]   stacked layer weights (f32/bf16, zero padded)
    # b_ref    : [2, L, 1, Dpad]      bias     (f32, zero padded)
    # g_ref    : [2, L, 1, Dpad]      LN gamma (f32, zero in padded lanes)
    # beta_ref : [2, L, 1, Dpad]      LN beta  (f32, zero in padded lanes)
    # hw_ref   : [2, Dpad, Hpad]      head weights (branch 0 = reg, 1 = class)
    # hb_ref   : [2, 1, Hpad]         head bias (f32)
    # reg_ref  : [bt, Hpad]           regression head output (col 0 valid)
    # cls_ref  : [bt, Hpad]           sigmoid(class head)    (cols 0..C-1 valid)
    mm_dtype = w_ref.dtype
    inv_w = jnp.float32(1.0 / valid_width)
    z = z_ref[...].astype(jnp.float32)

    def run_branch(br):
        h = z
        # Static unroll: all layer weights are VMEM-resident.
        # TODO(synk): for deep stacks switch to a lax.fori_loop / layer grid axis
        # so per-layer weights stream instead of being fully resident.
        for l in range(num_layers):
            y = jnp.dot(h.astype(mm_dtype), w_ref[br, l],
                        preferred_element_type=jnp.float32) + b_ref[br, l]
            # Padded W columns / bias lanes are zero, so y's padded lanes are
            # exactly 0: mask-free single-pass stats with 1/valid_width are exact.
            mean = jnp.sum(y, axis=-1, keepdims=True) * inv_w
            ex2 = jnp.sum(y * y, axis=-1, keepdims=True) * inv_w
            var = jnp.maximum(ex2 - mean * mean, 0.0)
            a = (y - mean) * jax.lax.rsqrt(var + _LN_EPS) * g_ref[br, l] + beta_ref[br, l]
            # SiLU; Dropout = identity in eval mode.
            h = a * jax.nn.sigmoid(a)
            # TODO(synk): training-mode dropout (pltpu.prng_random_bits mask) not implemented.
        return jnp.dot(h.astype(mm_dtype), hw_ref[br],
                       preferred_element_type=jnp.float32) + hb_ref[br]

    reg_ref[...] = run_branch(0)                      # regression: no sigmoid
    cls_ref[...] = jax.nn.sigmoid(run_branch(1))      # classification: sigmoid


# ----------------------------------------------------------------------------
# Parameter construction (logical / PyTorch-shaped) + packing for the kernel
# ----------------------------------------------------------------------------
def _linear_params(key, din, dout):
    kw, kb = jax.random.split(key)
    bound = 1.0 / jnp.sqrt(float(din))  # nn.Linear default init
    w = jax.random.uniform(kw, (din, dout), jnp.float32, -bound, bound)
    b = jax.random.uniform(kb, (1, dout), jnp.float32, -bound, bound)
    return w, b


def init_decoder_re_params(key, num_layers, hidden_width, z_dim, num_classes):
    params = {"reg_layers": [], "class_layers": []}
    for branch in ("reg_layers", "class_layers"):
        for ii in range(num_layers):
            din = z_dim if ii == 0 else hidden_width
            key, sub = jax.random.split(key)
            w, b = _linear_params(sub, din, hidden_width)
            params[branch].append({
                "w": w, "b": b,
                "gamma": jnp.ones((1, hidden_width), jnp.float32),
                "beta": jnp.zeros((1, hidden_width), jnp.float32),
            })
    key, k1 = jax.random.split(key)
    key, k2 = jax.random.split(key)
    params["out_class_w"], params["out_class_b"] = _linear_params(k1, hidden_width, num_classes)
    params["out_reg_w"], params["out_reg_b"] = _linear_params(k2, hidden_width, 1)
    return params


def pack_params(params, num_layers, hidden_width, z_dim, num_classes,
                matmul_dtype=jnp.float32):
    """Zero-pad to 128-lane widths, stack both branches, and cast the matmul
    operands (w, head_w) to `matmul_dtype` at pack time (bf16 for v5e/v6e/v7x MXU)."""
    dpad = _round_up(max(hidden_width, z_dim), _LANE)
    hpad = _round_up(max(num_classes, 1), _LANE)
    L = num_layers

    w = jnp.zeros((2, L, dpad, dpad), jnp.float32)
    b = jnp.zeros((2, L, 1, dpad), jnp.float32)
    g = jnp.zeros((2, L, 1, dpad), jnp.float32)     # gamma padding MUST be 0
    bt = jnp.zeros((2, L, 1, dpad), jnp.float32)
    for bi, branch in enumerate(("reg_layers", "class_layers")):
        for l, lp in enumerate(params[branch]):
            din, dout = lp["w"].shape
            w = w.at[bi, l, :din, :dout].set(lp["w"])
            b = b.at[bi, l, :, :dout].set(lp["b"])
            g = g.at[bi, l, :, :dout].set(lp["gamma"])
            bt = bt.at[bi, l, :, :dout].set(lp["beta"])

    hw = jnp.zeros((2, dpad, hpad), jnp.float32)
    hb = jnp.zeros((2, 1, hpad), jnp.float32)
    hw = hw.at[0, :hidden_width, :1].set(params["out_reg_w"])
    hb = hb.at[0, :, :1].set(params["out_reg_b"])
    hw = hw.at[1, :hidden_width, :num_classes].set(params["out_class_w"])
    hb = hb.at[1, :, :num_classes].set(params["out_class_b"])

    return {"w": w.astype(matmul_dtype), "b": b, "gamma": g, "beta": bt,
            "head_w": hw.astype(matmul_dtype), "head_b": hb,
            "hidden_width": hidden_width, "num_classes": num_classes,
            "z_dim": z_dim, "dpad": dpad, "hpad": hpad, "num_layers": L}


# ----------------------------------------------------------------------------
# Forward (matches Decoder_re.forward -> (reg_z, class_z))
# ----------------------------------------------------------------------------
def decoder_re_forward(packed, z, *, batch_tile=512):
    L = packed["num_layers"]
    dpad = packed["dpad"]
    hpad = packed["hpad"]
    B = z.shape[0]

    # Batch tiling: cap at batch_tile (amortizes per-step overhead, fills the
    # MXU M dim) while choosing the tile that minimizes padding (<= 7 rows).
    b8 = _round_up(B, 8)
    n_tiles = pl.cdiv(b8, batch_tile)
    bt = _round_up(-(-b8 // n_tiles), 8)
    bpad = bt * n_tiles

    z_p = jnp.zeros((bpad, dpad), jnp.float32).at[:B, : packed["z_dim"]].set(z)

    # Explicit VMEM budget: single-buffered resident params + double-buffered
    # z / output tiles + headroom, clamped under v7x's 64 MiB physical VMEM.
    param_bytes = sum(int(packed[k].size) * packed[k].dtype.itemsize
                      for k in ("w", "b", "gamma", "beta", "head_w", "head_b"))
    io_bytes = 2 * bt * dpad * 4 + 2 * 2 * bt * hpad * 4
    vmem_limit = int(min(max(param_bytes + io_bytes + (4 << 20), 16 << 20), 64 << 20))

    kernel = functools.partial(_fused_decoder_kernel, num_layers=L,
                               valid_width=packed["hidden_width"])

    # Untiled VMEM-resident params: single copy, no per-step DMA / double buffer.
    vmem_full = pl.BlockSpec(memory_space=pltpu.MemorySpace.VMEM)

    reg, cls = pl.pallas_call(
        kernel,
        out_shape=(jax.ShapeDtypeStruct((bpad, hpad), jnp.float32),
                   jax.ShapeDtypeStruct((bpad, hpad), jnp.float32)),
        grid_spec=pltpu.PrefetchScalarGridSpec(
            num_scalar_prefetch=0,
            grid=(n_tiles,),
            in_specs=[
                pl.BlockSpec((bt, dpad), lambda i: (i, 0)),   # z, batch-tiled
                vmem_full,   # w       [2, L, Dpad, Dpad]
                vmem_full,   # b       [2, L, 1, Dpad]
                vmem_full,   # gamma   [2, L, 1, Dpad]
                vmem_full,   # beta    [2, L, 1, Dpad]
                vmem_full,   # head_w  [2, Dpad, Hpad]
                vmem_full,   # head_b  [2, 1, Hpad]
            ],
            out_specs=[pl.BlockSpec((bt, hpad), lambda i: (i, 0)),
                       pl.BlockSpec((bt, hpad), lambda i: (i, 0))],
        ),
        compiler_params=pltpu.CompilerParams(
            dimension_semantics=("parallel",),
            vmem_limit_bytes=vmem_limit),
    )(z_p, packed["w"], packed["b"], packed["gamma"], packed["beta"],
      packed["head_w"], packed["head_b"])

    return reg[:B, :1], cls[:B, :packed["num_classes"]]


# ----------------------------------------------------------------------------
# Pure-JAX reference (operates on the logical, unpadded f32 parameters)
# ----------------------------------------------------------------------------
def _ref_forward(params, z):
    def layer(x, lp):
        h = x @ lp["w"] + lp["b"]
        mean = jnp.mean(h, -1, keepdims=True)
        var = jnp.mean((h - mean) ** 2, -1, keepdims=True)
        y = (h - mean) / jnp.sqrt(var + _LN_EPS) * lp["gamma"] + lp["beta"]
        return y * jax.nn.sigmoid(y)

    h = z
    for lp in params["reg_layers"]:
        h = layer(h, lp)
    reg = h @ params["out_reg_w"] + params["out_reg_b"]
    h = z
    for lp in params["class_layers"]:
        h = layer(h, lp)
    cls = jax.nn.sigmoid(h @ params["out_class_w"] + params["out_class_b"])
    return reg, cls


if __name__ == "__main__":
    # Small, module-consistent shapes
    num_layers = 2
    hidden_width = 64
    z_dim = 32
    num_classes = 4
    batch = 8

    key = jax.random.PRNGKey(0)
    kp, kz = jax.random.split(key)
    params = init_decoder_re_params(kp, num_layers, hidden_width, z_dim, num_classes)
    z = jax.random.normal(kz, (batch, z_dim), jnp.float32)
    reg_ref, class_ref = _ref_forward(params, z)

    # f32 matmul path: strict check vs pure-JAX reference
    packed_f32 = pack_params(params, num_layers, hidden_width, z_dim, num_classes,
                             matmul_dtype=jnp.float32)
    reg_out, class_out = decoder_re_forward(packed_f32, z)
    jax.block_until_ready((reg_out, class_out))
    assert reg_out.shape == (batch, 1)
    assert class_out.shape == (batch, num_classes)
    assert jnp.allclose(reg_out, reg_ref, atol=1e-4, rtol=1e-4)
    assert jnp.allclose(class_out, class_ref, atol=1e-4, rtol=1e-4)

    # Multi-tile path (3 grid steps) to exercise the pipelined batch axis
    kz2 = jax.random.PRNGKey(1)
    z_big = jax.random.normal(kz2, (24, z_dim), jnp.float32)
    reg_big, class_big = decoder_re_forward(packed_f32, z_big, batch_tile=8)
    jax.block_until_ready((reg_big, class_big))
    reg_big_ref, class_big_ref = _ref_forward(params, z_big)
    assert jnp.allclose(reg_big, reg_big_ref, atol=1e-4, rtol=1e-4)
    assert jnp.allclose(class_big, class_big_ref, atol=1e-4, rtol=1e-4)

    # bf16 matmul path (MXU-friendly, weights stored bf16 at pack time): looser tol
    packed_bf16 = pack_params(params, num_layers, hidden_width, z_dim, num_classes,
                              matmul_dtype=jnp.bfloat16)
    reg_bf, class_bf = decoder_re_forward(packed_bf16, z)
    jax.block_until_ready((reg_bf, class_bf))
    assert jnp.allclose(reg_bf, reg_ref, atol=5e-2, rtol=5e-2)
    assert jnp.allclose(class_bf, class_ref, atol=5e-2, rtol=5e-2)

    print("KERNEL_OK")
</pallas_src>

<mosaic_0001>
module attributes {stable_mosaic.version = 11 : i64} {
  func.func @_fused_decoder_kernel(%arg0: i32, %arg1: memref<8x128xf32, #tpu.memory_space<vmem>>, %arg2: memref<2x2x128x128xf32, #tpu.memory_space<vmem>>, %arg3: memref<2x2x1x128xf32, #tpu.memory_space<vmem>>, %arg4: memref<2x2x1x128xf32, #tpu.memory_space<vmem>>, %arg5: memref<2x2x1x128xf32, #tpu.memory_space<vmem>>, %arg6: memref<2x128x128xf32, #tpu.memory_space<vmem>>, %arg7: memref<2x1x128xf32, #tpu.memory_space<vmem>>, %arg8: memref<8x128xf32, #tpu.memory_space<vmem>>, %arg9: memref<8x128xf32, #tpu.memory_space<vmem>>) attributes {dimension_semantics = [#tpu.dimension_semantics<parallel>], iteration_bounds = array<i64: 1>, scalar_prefetch = 0 : i64, scratch_operands = 0 : i64, tpu.core_type = #tpu.core_type<tc>, window_params = [{transform_indices = @transform_0, window_bounds = array<i64: 8, 128>}, {pipeline_mode = #tpu.pipeline_mode<synchronous>, transform_indices = @transform_1, window_bounds = array<i64: 2, 2, 128, 128>}, {pipeline_mode = #tpu.pipeline_mode<synchronous>, transform_indices = @transform_2, window_bounds = array<i64: 2, 2, 1, 128>}, {pipeline_mode = #tpu.pipeline_mode<synchronous>, transform_indices = @transform_3, window_bounds = array<i64: 2, 2, 1, 128>}, {pipeline_mode = #tpu.pipeline_mode<synchronous>, transform_indices = @transform_4, window_bounds = array<i64: 2, 2, 1, 128>}, {pipeline_mode = #tpu.pipeline_mode<synchronous>, transform_indices = @transform_5, window_bounds = array<i64: 2, 128, 128>}, {pipeline_mode = #tpu.pipeline_mode<synchronous>, transform_indices = @transform_6, window_bounds = array<i64: 2, 1, 128>}, {transform_indices = @transform_7, window_bounds = array<i64: 8, 128>}, {transform_indices = @transform_8, window_bounds = array<i64: 8, 128>}]} {
    %c0 = arith.constant 0 : index
    %c0_0 = arith.constant 0 : index
    %0 = vector.load %arg1[%c0, %c0_0] : memref<8x128xf32, #tpu.memory_space<vmem>>, vector<8x128xf32>
    %c0_1 = arith.constant 0 : index
    %c0_2 = arith.constant 0 : index
    %c0_3 = arith.constant 0 : index
    %c0_4 = arith.constant 0 : index
    %1 = vector.load %arg2[%c0_1, %c0_2, %c0_3, %c0_4] : memref<2x2x128x128xf32, #tpu.memory_space<vmem>>, vector<1x1x128x128xf32>
    %2 = vector.shape_cast %1 : vector<1x1x128x128xf32> to vector<128x128xf32>
    %cst = arith.constant dense<0.000000e+00> : vector<8x128xf32>
    %3 = tpu.matmul %0, %2, %cst {dimension_numbers = #tpu.dot_dimension_numbers<[1], [0], [0], [1], [0, 0, 1, 1], [], []>} : vector<8x128xf32>, vector<128x128xf32>, vector<8x128xf32> -> vector<8x128xf32>
    %c0_5 = arith.constant 0 : index
    %c0_6 = arith.constant 0 : index
    %c0_7 = arith.constant 0 : index
    %c0_8 = arith.constant 0 : index
    %4 = vector.load %arg3[%c0_5, %c0_6, %c0_7, %c0_8] : memref<2x2x1x128xf32, #tpu.memory_space<vmem>>, vector<1x1x1x128xf32>
    %5 = vector.shape_cast %4 : vector<1x1x1x128xf32> to vector<1x128xf32>
    %6 = vector.broadcast %5 : vector<1x128xf32> to vector<8x128xf32>
    %7 = arith.addf %3, %6 : vector<8x128xf32>
    %cst_9 = arith.constant dense<0.000000e+00> : vector<8xf32>
    %8 = vector.multi_reduction <add>, %7, %cst_9 [1] : vector<8x128xf32> to vector<8xf32>
    %9 = vector.shape_cast %8 : vector<8xf32> to vector<8x1xf32>
    %cst_10 = arith.constant 1.562500e-02 : f32
    %10 = vector.broadcast %cst_10 : f32 to vector<8x1xf32>
    %11 = arith.mulf %9, %10 : vector<8x1xf32>
    %12 = arith.mulf %7, %7 : vector<8x128xf32>
    %cst_11 = arith.constant dense<0.000000e+00> : vector<8xf32>
    %13 = vector.multi_reduction <add>, %12, %cst_11 [1] : vector<8x128xf32> to vector<8xf32>
    %14 = vector.shape_cast %13 : vector<8xf32> to vector<8x1xf32>
    %cst_12 = arith.constant 1.562500e-02 : f32
    %15 = vector.broadcast %cst_12 : f32 to vector<8x1xf32>
    %16 = arith.mulf %14, %15 : vector<8x1xf32>
    %17 = arith.mulf %11, %11 : vector<8x1xf32>
    %18 = arith.subf %16, %17 : vector<8x1xf32>
    %cst_13 = arith.constant 0.000000e+00 : f32
    %19 = vector.broadcast %cst_13 : f32 to vector<8x1xf32>
    %20 = arith.maximumf %18, %19 : vector<8x1xf32>
    %21 = vector.broadcast %11 : vector<8x1xf32> to vector<8x128xf32>
    %22 = arith.subf %7, %21 : vector<8x128xf32>
    %cst_14 = arith.constant 9.99999974E-6 : f32
    %23 = vector.broadcast %cst_14 : f32 to vector<8x1xf32>
    %24 = arith.addf %20, %23 : vector<8x1xf32>
    %25 = math.rsqrt %24 : vector<8x1xf32>
    %26 = vector.broadcast %25 : vector<8x1xf32> to vector<8x128xf32>
    %27 = arith.mulf %22, %26 : vector<8x128xf32>
    %c0_15 = arith.constant 0 : index
    %c0_16 = arith.constant 0 : index
    %c0_17 = arith.constant 0 : index
    %c0_18 = arith.constant 0 : index
    %28 = vector.load %arg4[%c0_15, %c0_16, %c0_17, %c0_18] : memref<2x2x1x128xf32, #tpu.memory_space<vmem>>, vector<1x1x1x128xf32>
    %29 = vector.shape_cast %28 : vector<1x1x1x128xf32> to vector<1x128xf32>
    %30 = vector.broadcast %29 : vector<1x128xf32> to vector<8x128xf32>
    %31 = arith.mulf %27, %30 : vector<8x128xf32>
    %c0_19 = arith.constant 0 : index
    %c0_20 = arith.constant 0 : index
    %c0_21 = arith.constant 0 : index
    %c0_22 = arith.constant 0 : index
    %32 = vector.load %arg5[%c0_19, %c0_20, %c0_21, %c0_22] : memref<2x2x1x128xf32, #tpu.memory_space<vmem>>, vector<1x1x1x128xf32>
    %33 = vector.shape_cast %32 : vector<1x1x1x128xf32> to vector<1x128xf32>
    %34 = vector.broadcast %33 : vector<1x128xf32> to vector<8x128xf32>
    %35 = arith.addf %31, %34 : vector<8x128xf32>
    %36 = arith.negf %35 : vector<8x128xf32>
    %37 = math.exp %36 : vector<8x128xf32>
    %cst_23 = arith.constant 1.000000e+00 : f32
    %38 = vector.broadcast %cst_23 : f32 to vector<8x128xf32>
    %39 = arith.addf %38, %37 : vector<8x128xf32>
    %40 = arith.divf %38, %39 : vector<8x128xf32>
    %41 = arith.mulf %35, %40 : vector<8x128xf32>
    %c0_24 = arith.constant 0 : index
    %c1 = arith.constant 1 : index
    %c0_25 = arith.constant 0 : index
    %c0_26 = arith.constant 0 : index
    %42 = vector.load %arg2[%c0_24, %c1, %c0_25, %c0_26] : memref<2x2x128x128xf32, #tpu.memory_space<vmem>>, vector<1x1x128x128xf32>
    %43 = vector.shape_cast %42 : vector<1x1x128x128xf32> to vector<128x128xf32>
    %cst_27 = arith.constant dense<0.000000e+00> : vector<8x128xf32>
    %44 = tpu.matmul %41, %43, %cst_27 {dimension_numbers = #tpu.dot_dimension_numbers<[1], [0], [0], [1], [0, 0, 1, 1], [], []>} : vector<8x128xf32>, vector<128x128xf32>, vector<8x128xf32> -> vector<8x128xf32>
    %c0_28 = arith.constant 0 : index
    %c1_29 = arith.constant 1 : index
    %c0_30 = arith.constant 0 : index
    %c0_31 = arith.constant 0 : index
    %45 = vector.load %arg3[%c0_28, %c1_29, %c0_30, %c0_31] : memref<2x2x1x128xf32, #tpu.memory_space<vmem>>, vector<1x1x1x128xf32>
    %46 = vector.shape_cast %45 : vector<1x1x1x128xf32> to vector<1x128xf32>
    %47 = vector.broadcast %46 : vector<1x128xf32> to vector<8x128xf32>
    %48 = arith.addf %44, %47 : vector<8x128xf32>
    %cst_32 = arith.constant dense<0.000000e+00> : vector<8xf32>
    %49 = vector.multi_reduction <add>, %48, %cst_32 [1] : vector<8x128xf32> to vector<8xf32>
    %50 = vector.shape_cast %49 : vector<8xf32> to vector<8x1xf32>
    %cst_33 = arith.constant 1.562500e-02 : f32
    %51 = vector.broadcast %cst_33 : f32 to vector<8x1xf32>
    %52 = arith.mulf %50, %51 : vector<8x1xf32>
    %53 = arith.mulf %48, %48 : vector<8x128xf32>
    %cst_34 = arith.constant dense<0.000000e+00> : vector<8xf32>
    %54 = vector.multi_reduction <add>, %53, %cst_34 [1] : vector<8x128xf32> to vector<8xf32>
    %55 = vector.shape_cast %54 : vector<8xf32> to vector<8x1xf32>
    %cst_35 = arith.constant 1.562500e-02 : f32
    %56 = vector.broadcast %cst_35 : f32 to vector<8x1xf32>
    %57 = arith.mulf %55, %56 : vector<8x1xf32>
    %58 = arith.mulf %52, %52 : vector<8x1xf32>
    %59 = arith.subf %57, %58 : vector<8x1xf32>
    %cst_36 = arith.constant 0.000000e+00 : f32
    %60 = vector.broadcast %cst_36 : f32 to vector<8x1xf32>
    %61 = arith.maximumf %59, %60 : vector<8x1xf32>
    %62 = vector.broadcast %52 : vector<8x1xf32> to vector<8x128xf32>
    %63 = arith.subf %48, %62 : vector<8x128xf32>
    %cst_37 = arith.constant 9.99999974E-6 : f32
    %64 = vector.broadcast %cst_37 : f32 to vector<8x1xf32>
    %65 = arith.addf %61, %64 : vector<8x1xf32>
    %66 = math.rsqrt %65 : vector<8x1xf32>
    %67 = vector.broadcast %66 : vector<8x1xf32> to vector<8x128xf32>
    %68 = arith.mulf %63, %67 : vector<8x128xf32>
    %c0_38 = arith.constant 0 : index
    %c1_39 = arith.constant 1 : index
    %c0_40 = arith.constant 0 : index
    %c0_41 = arith.constant 0 : index
    %69 = vector.load %arg4[%c0_38, %c1_39, %c0_40, %c0_41] : memref<2x2x1x128xf32, #tpu.memory_space<vmem>>, vector<1x1x1x128xf32>
    %70 = vector.shape_cast %69 : vector<1x1x1x128xf32> to vector<1x128xf32>
    %71 = vector.broadcast %70 : vector<1x128xf32> to vector<8x128xf32>
    %72 = arith.mulf %68, %71 : vector<8x128xf32>
    %c0_42 = arith.constant 0 : index
    %c1_43 = arith.constant 1 : index
    %c0_44 = arith.constant 0 : index
    %c0_45 = arith.constant 0 : index
    %73 = vector.load %arg5[%c0_42, %c1_43, %c0_44, %c0_45] : memref<2x2x1x128xf32, #tpu.memory_space<vmem>>, vector<1x1x1x128xf32>
    %74 = vector.shape_cast %73 : vector<1x1x1x128xf32> to vector<1x128xf32>
    %75 = vector.broadcast %74 : vector<1x128xf32> to vector<8x128xf32>
    %76 = arith.addf %72, %75 : vector<8x128xf32>
    %77 = arith.negf %76 : vector<8x128xf32>
    %78 = math.exp %77 : vector<8x128xf32>
    %cst_46 = arith.constant 1.000000e+00 : f32
    %79 = vector.broadcast %cst_46 : f32 to vector<8x128xf32>
    %80 = arith.addf %79, %78 : vector<8x128xf32>
    %81 = arith.divf %79, %80 : vector<8x128xf32>
    %82 = arith.mulf %76, %81 : vector<8x128xf32>
    %c0_47 = arith.constant 0 : index
    %c0_48 = arith.constant 0 : index
    %c0_49 = arith.constant 0 : index
    %83 = vector.load %arg6[%c0_47, %c0_48, %c0_49] : memref<2x128x128xf32, #tpu.memory_space<vmem>>, vector<1x128x128xf32>
    %84 = vector.shape_cast %83 : vector<1x128x128xf32> to vector<128x128xf32>
    %cst_50 = arith.constant dense<0.000000e+00> : vector<8x128xf32>
    %85 = tpu.matmul %82, %84, %cst_50 {dimension_numbers = #tpu.dot_dimension_numbers<[1], [0], [0], [1], [0, 0, 1, 1], [], []>} : vector<8x128xf32>, vector<128x128xf32>, vector<8x128xf32> -> vector<8x128xf32>
    %c0_51 = arith.constant 0 : index
    %c0_52 = arith.constant 0 : index
    %c0_53 = arith.constant 0 : index
    %86 = vector.load %arg7[%c0_51, %c0_52, %c0_53] : memref<2x1x128xf32, #tpu.memory_space<vmem>>, vector<1x1x128xf32>
    %87 = vector.shape_cast %86 : vector<1x1x128xf32> to vector<1x128xf32>
    %88 = vector.broadcast %87 : vector<1x128xf32> to vector<8x128xf32>
    %89 = arith.addf %85, %88 : vector<8x128xf32>
    %c0_54 = arith.constant 0 : index
    %c0_55 = arith.constant 0 : index
    %90 = vector.load %arg8[%c0_54, %c0_55] : memref<8x128xf32, #tpu.memory_space<vmem>>, vector<8x128xf32>
    tpu.vector_store %arg8[%c0_54, %c0_55], %89 {strides = array<i32>} : memref<8x128xf32, #tpu.memory_space<vmem>>, vector<8x128xf32>,
    %c1_56 = arith.constant 1 : index
    %c0_57 = arith.constant 0 : index
    %c0_58 = arith.constant 0 : index
    %c0_59 = arith.constant 0 : index
    %91 = vector.load %arg2[%c1_56, %c0_57, %c0_58, %c0_59] : memref<2x2x128x128xf32, #tpu.memory_space<vmem>>, vector<1x1x128x128xf32>
    %92 = vector.shape_cast %91 : vector<1x1x128x128xf32> to vector<128x128xf32>
    %cst_60 = arith.constant dense<0.000000e+00> : vector<8x128xf32>
    %93 = tpu.matmul %0, %92, %cst_60 {dimension_numbers = #tpu.dot_dimension_numbers<[1], [0], [0], [1], [0, 0, 1, 1], [], []>} : vector<8x128xf32>, vector<128x128xf32>, vector<8x128xf32> -> vector<8x128xf32>
    %c1_61 = arith.constant 1 : index
    %c0_62 = arith.constant 0 : index
    %c0_63 = arith.constant 0 : index
    %c0_64 = arith.constant 0 : index
    %94 = vector.load %arg3[%c1_61, %c0_62, %c0_63, %c0_64] : memref<2x2x1x128xf32, #tpu.memory_space<vmem>>, vector<1x1x1x128xf32>
    %95 = vector.shape_cast %94 : vector<1x1x1x128xf32> to vector<1x128xf32>
    %96 = vector.broadcast %95 : vector<1x128xf32> to vector<8x128xf32>
    %97 = arith.addf %93, %96 : vector<8x128xf32>
    %cst_65 = arith.constant dense<0.000000e+00> : vector<8xf32>
    %98 = vector.multi_reduction <add>, %97, %cst_65 [1] : vector<8x128xf32> to vector<8xf32>
    %99 = vector.shape_cast %98 : vector<8xf32> to vector<8x1xf32>
    %cst_66 = arith.constant 1.562500e-02 : f32
    %100 = vector.broadcast %cst_66 : f32 to vector<8x1xf32>
    %101 = arith.mulf %99, %100 : vector<8x1xf32>
    %102 = arith.mulf %97, %97 : vector<8x128xf32>
    %cst_67 = arith.constant dense<0.000000e+00> : vector<8xf32>
    %103 = vector.multi_reduction <add>, %102, %cst_67 [1] : vector<8x128xf32> to vector<8xf32>
    %104 = vector.shape_cast %103 : vector<8xf32> to vector<8x1xf32>
    %cst_68 = arith.constant 1.562500e-02 : f32
    %105 = vector.broadcast %cst_68 : f32 to vector<8x1xf32>
    %106 = arith.mulf %104, %105 : vector<8x1xf32>
    %107 = arith.mulf %101, %101 : vector<8x1xf32>
    %108 = arith.subf %106, %107 : vector<8x1xf32>
    %cst_69 = arith.constant 0.000000e+00 : f32
    %109 = vector.broadcast %cst_69 : f32 to vector<8x1xf32>
    %110 = arith.maximumf %108, %109 : vector<8x1xf32>
    %111 = vector.broadcast %101 : vector<8x1xf32> to vector<8x128xf32>
    %112 = arith.subf %97, %111 : vector<8x128xf32>
    %cst_70 = arith.constant 9.99999974E-6 : f32
    %113 = vector.broadcast %cst_70 : f32 to vector<8x1xf32>
    %114 = arith.addf %110, %113 : vector<8x1xf32>
    %115 = math.rsqrt %114 : vector<8x1xf32>
    %116 = vector.broadcast %115 : vector<8x1xf32> to vector<8x128xf32>
    %117 = arith.mulf %112, %116 : vector<8x128xf32>
    %c1_71 = arith.constant 1 : index
    %c0_72 = arith.constant 0 : index
    %c0_73 = arith.constant 0 : index
    %c0_74 = arith.constant 0 : index
    %118 = vector.load %arg4[%c1_71, %c0_72, %c0_73, %c0_74] : memref<2x2x1x128xf32, #tpu.memory_space<vmem>>, vector<1x1x1x128xf32>
    %119 = vector.shape_cast %118 : vector<1x1x1x128xf32> to vector<1x128xf32>
    %120 = vector.broadcast %119 : vector<1x128xf32> to vector<8x128xf32>
    %121 = arith.mulf %117, %120 : vector<8x128xf32>
    %c1_75 = arith.constant 1 : index
    %c0_76 = arith.constant 0 : index
    %c0_77 = arith.constant 0 : index
    %c0_78 = arith.constant 0 : index
    %122 = vector.load %arg5[%c1_75, %c0_76, %c0_77, %c0_78] : memref<2x2x1x128xf32, #tpu.memory_space<vmem>>, vector<1x1x1x128xf32>
    %123 = vector.shape_cast %122 : vector<1x1x1x128xf32> to vector<1x128xf32>
    %124 = vector.broadcast %123 : vector<1x128xf32> to vector<8x128xf32>
    %125 = arith.addf %121, %124 : vector<8x128xf32>
    %126 = arith.negf %125 : vector<8x128xf32>
    %127 = math.exp %126 : vector<8x128xf32>
    %cst_79 = arith.constant 1.000000e+00 : f32
    %128 = vector.broadcast %cst_79 : f32 to vector<8x128xf32>
    %129 = arith.addf %128, %127 : vector<8x128xf32>
    %130 = arith.divf %128, %129 : vector<8x128xf32>
    %131 = arith.mulf %125, %130 : vector<8x128xf32>
    %c1_80 = arith.constant 1 : index
    %c1_81 = arith.constant 1 : index
    %c0_82 = arith.constant 0 : index
    %c0_83 = arith.constant 0 : index
    %132 = vector.load %arg2[%c1_80, %c1_81, %c0_82, %c0_83] : memref<2x2x128x128xf32, #tpu.memory_space<vmem>>, vector<1x1x128x128xf32>
    %133 = vector.shape_cast %132 : vector<1x1x128x128xf32> to vector<128x128xf32>
    %cst_84 = arith.constant dense<0.000000e+00> : vector<8x128xf32>
    %134 = tpu.matmul %131, %133, %cst_84 {dimension_numbers = #tpu.dot_dimension_numbers<[1], [0], [0], [1], [0, 0, 1, 1], [], []>} : vector<8x128xf32>, vector<128x128xf32>, vector<8x128xf32> -> vector<8x128xf32>
    %c1_85 = arith.constant 1 : index
    %c1_86 = arith.constant 1 : index
    %c0_87 = arith.constant 0 : index
    %c0_88 = arith.constant 0 : index
    %135 = vector.load %arg3[%c1_85, %c1_86, %c0_87, %c0_88] : memref<2x2x1x128xf32, #tpu.memory_space<vmem>>, vector<1x1x1x128xf32>
    %136 = vector.shape_cast %135 : vector<1x1x1x128xf32> to vector<1x128xf32>
    %137 = vector.broadcast %136 : vector<1x128xf32> to vector<8x128xf32>
    %138 = arith.addf %134, %137 : vector<8x128xf32>
    %cst_89 = arith.constant dense<0.000000e+00> : vector<8xf32>
    %139 = vector.multi_reduction <add>, %138, %cst_89 [1] : vector<8x128xf32> to vector<8xf32>
    %140 = vector.shape_cast %139 : vector<8xf32> to vector<8x1xf32>
    %cst_90 = arith.constant 1.562500e-02 : f32
    %141 = vector.broadcast %cst_90 : f32 to vector<8x1xf32>
    %142 = arith.mulf %140, %141 : vector<8x1xf32>
    %143 = arith.mulf %138, %138 : vector<8x128xf32>
    %cst_91 = arith.constant dense<0.000000e+00> : vector<8xf32>
    %144 = vector.multi_reduction <add>, %143, %cst_91 [1] : vector<8x128xf32> to vector<8xf32>
    %145 = vector.shape_cast %144 : vector<8xf32> to vector<8x1xf32>
    %cst_92 = arith.constant 1.562500e-02 : f32
    %146 = vector.broadcast %cst_92 : f32 to vector<8x1xf32>
    %147 = arith.mulf %145, %146 : vector<8x1xf32>
    %148 = arith.mulf %142, %142 : vector<8x1xf32>
    %149 = arith.subf %147, %148 : vector<8x1xf32>
    %cst_93 = arith.constant 0.000000e+00 : f32
    %150 = vector.broadcast %cst_93 : f32 to vector<8x1xf32>
    %151 = arith.maximumf %149, %150 : vector<8x1xf32>
    %152 = vector.broadcast %142 : vector<8x1xf32> to vector<8x128xf32>
    %153 = arith.subf %138, %152 : vector<8x128xf32>
    %cst_94 = arith.constant 9.99999974E-6 : f32
    %154 = vector.broadcast %cst_94 : f32 to vector<8x1xf32>
    %155 = arith.addf %151, %154 : vector<8x1xf32>
    %156 = math.rsqrt %155 : vector<8x1xf32>
    %157 = vector.broadcast %156 : vector<8x1xf32> to vector<8x128xf32>
    %158 = arith.mulf %153, %157 : vector<8x128xf32>
    %c1_95 = arith.constant 1 : index
    %c1_96 = arith.constant 1 : index
    %c0_97 = arith.constant 0 : index
    %c0_98 = arith.constant 0 : index
    %159 = vector.load %arg4[%c1_95, %c1_96, %c0_97, %c0_98] : memref<2x2x1x128xf32, #tpu.memory_space<vmem>>, vector<1x1x1x128xf32>
    %160 = vector.shape_cast %159 : vector<1x1x1x128xf32> to vector<1x128xf32>
    %161 = vector.broadcast %160 : vector<1x128xf32> to vector<8x128xf32>
    %162 = arith.mulf %158, %161 : vector<8x128xf32>
    %c1_99 = arith.constant 1 : index
    %c1_100 = arith.constant 1 : index
    %c0_101 = arith.constant 0 : index
    %c0_102 = arith.constant 0 : index
    %163 = vector.load %arg5[%c1_99, %c1_100, %c0_101, %c0_102] : memref<2x2x1x128xf32, #tpu.memory_space<vmem>>, vector<1x1x1x128xf32>
    %164 = vector.shape_cast %163 : vector<1x1x1x128xf32> to vector<1x128xf32>
    %165 = vector.broadcast %164 : vector<1x128xf32> to vector<8x128xf32>
    %166 = arith.addf %162, %165 : vector<8x128xf32>
    %167 = arith.negf %166 : vector<8x128xf32>
    %168 = math.exp %167 : vector<8x128xf32>
    %cst_103 = arith.constant 1.000000e+00 : f32
    %169 = vector.broadcast %cst_103 : f32 to vector<8x128xf32>
    %170 = arith.addf %169, %168 : vector<8x128xf32>
    %171 = arith.divf %169, %170 : vector<8x128xf32>
    %172 = arith.mulf %166, %171 : vector<8x128xf32>
    %c1_104 = arith.constant 1 : index
    %c0_105 = arith.constant 0 : index
    %c0_106 = arith.constant 0 : index
    %173 = vector.load %arg6[%c1_104, %c0_105, %c0_106] : memref<2x128x128xf32, #tpu.memory_space<vmem>>, vector<1x128x128xf32>
    %174 = vector.shape_cast %173 : vector<1x128x128xf32> to vector<128x128xf32>
    %cst_107 = arith.constant dense<0.000000e+00> : vector<8x128xf32>
    %175 = tpu.matmul %172, %174, %cst_107 {dimension_numbers = #tpu.dot_dimension_numbers<[1], [0], [0], [1], [0, 0, 1, 1], [], []>} : vector<8x128xf32>, vector<128x128xf32>, vector<8x128xf32> -> vector<8x128xf32>
    %c1_108 = arith.constant 1 : index
    %c0_109 = arith.constant 0 : index
    %c0_110 = arith.constant 0 : index
    %176 = vector.load %arg7[%c1_108, %c0_109, %c0_110] : memref<2x1x128xf32, #tpu.memory_space<vmem>>, vector<1x1x128xf32>
    %177 = vector.shape_cast %176 : vector<1x1x128xf32> to vector<1x128xf32>
    %178 = vector.broadcast %177 : vector<1x128xf32> to vector<8x128xf32>
    %179 = arith.addf %175, %178 : vector<8x128xf32>
    %180 = arith.negf %179 : vector<8x128xf32>
    %181 = math.exp %180 : vector<8x128xf32>
    %cst_111 = arith.constant 1.000000e+00 : f32
    %182 = vector.broadcast %cst_111 : f32 to vector<8x128xf32>
    %183 = arith.addf %182, %181 : vector<8x128xf32>
    %184 = arith.divf %182, %183 : vector<8x128xf32>
    %c0_112 = arith.constant 0 : index
    %c0_113 = arith.constant 0 : index
    %185 = vector.load %arg9[%c0_112, %c0_113] : memref<8x128xf32, #tpu.memory_space<vmem>>, vector<8x128xf32>
    tpu.vector_store %arg9[%c0_112, %c0_113], %184 {strides = array<i32>} : memref<8x128xf32, #tpu.memory_space<vmem>>, vector<8x128xf32>,
    return
  }
  func.func @transform_0(%arg0: i32) -> (i32, i32) {
    %c0_i32 = arith.constant 0 : i32
    %c0_i32_0 = arith.constant 0 : i32
    return %arg0, %c0_i32 : i32, i32
  }
  func.func @transform_1(%arg0: i32) -> (i32, i32, i32, i32) {
    %c0_i32 = arith.constant 0 : i32
    %c0_i32_0 = arith.constant 0 : i32
    %c0_i32_1 = arith.constant 0 : i32
    %c0_i32_2 = arith.constant 0 : i32
    %c0_i32_3 = arith.constant 0 : i32
    return %c0_i32, %c0_i32_0, %c0_i32_1, %c0_i32_2 : i32, i32, i32, i32
  }
  func.func @transform_2(%arg0: i32) -> (i32, i32, i32, i32) {
    %c0_i32 = arith.constant 0 : i32
    %c0_i32_0 = arith.constant 0 : i32
    %c0_i32_1 = arith.constant 0 : i32
    %c0_i32_2 = arith.constant 0 : i32
    %c0_i32_3 = arith.constant 0 : i32
    return %c0_i32, %c0_i32_0, %c0_i32_1, %c0_i32_2 : i32, i32, i32, i32
  }
  func.func @transform_3(%arg0: i32) -> (i32, i32, i32, i32) {
    %c0_i32 = arith.constant 0 : i32
    %c0_i32_0 = arith.constant 0 : i32
    %c0_i32_1 = arith.constant 0 : i32
    %c0_i32_2 = arith.constant 0 : i32
    %c0_i32_3 = arith.constant 0 : i32
    return %c0_i32, %c0_i32_0, %c0_i32_1, %c0_i32_2 : i32, i32, i32, i32
  }
  func.func @transform_4(%arg0: i32) -> (i32, i32, i32, i32) {
    %c0_i32 = arith.constant 0 : i32
    %c0_i32_0 = arith.constant 0 : i32
    %c0_i32_1 = arith.constant 0 : i32
    %c0_i32_2 = arith.constant 0 : i32
    %c0_i32_3 = arith.constant 0 : i32
    return %c0_i32, %c0_i32_0, %c0_i32_1, %c0_i32_2 : i32, i32, i32, i32
  }
  func.func @transform_5(%arg0: i32) -> (i32, i32, i32) {
    %c0_i32 = arith.constant 0 : i32
    %c0_i32_0 = arith.constant 0 : i32
    %c0_i32_1 = arith.constant 0 : i32
    %c0_i32_2 = arith.constant 0 : i32
    return %c0_i32, %c0_i32_0, %c0_i32_1 : i32, i32, i32
  }
  func.func @transform_6(%arg0: i32) -> (i32, i32, i32) {
    %c0_i32 = arith.constant 0 : i32
    %c0_i32_0 = arith.constant 0 : i32
    %c0_i32_1 = arith.constant 0 : i32
    %c0_i32_2 = arith.constant 0 : i32
    return %c0_i32, %c0_i32_0, %c0_i32_1 : i32, i32, i32
  }
  func.func @transform_7(%arg0: i32) -> (i32, i32) {
    %c0_i32 = arith.constant 0 : i32
    %c0_i32_0 = arith.constant 0 : i32
    return %arg0, %c0_i32 : i32, i32
  }
  func.func @transform_8(%arg0: i32) -> (i32, i32) {
    %c0_i32 = arith.constant 0 : i32
    %c0_i32_0 = arith.constant 0 : i32
    return %arg0, %c0_i32 : i32, i32
  }
}

</mosaic_0001>

<llo_original>
// kernel: tpu_custom_call.1
$region0: #{tpu_custom_call.1}
  #allocation0 [shape = 'u32[]', space=smem, size = 0x4, offset = 0x4, fixed_abs, tag = 'smem constant byte address 0x4 - core index']
  #allocation1 [shape = 'u32[144,128]{1,0:T(1,128)}', space=vmem, size = 0x12000, scoped, tag = 'internal scratch']
  %s0 = inlined_call_operand.hbm [shape: f32[8,128], index: 0, kind: input, shape index: {}]
  %s1 = inlined_call_operand.hbm [shape: f32[2,2,128,128], index: 1, kind: input, shape index: {}]
  %s2 = inlined_call_operand.hbm [shape: f32[2,2,1,128], index: 2, kind: input, shape index: {}]
  %s3 = inlined_call_operand.vmem [shape: f32[2,2,1,128], index: 3, kind: input, shape index: {}]
  %s4 = inlined_call_operand.hbm [shape: f32[2,2,1,128], index: 4, kind: input, shape index: {}]
  %s5 = inlined_call_operand.hbm [shape: f32[2,128,128], index: 5, kind: input, shape index: {}]
  %s6 = inlined_call_operand.vmem [shape: f32[2,1,128], index: 6, kind: input, shape index: {}]
  %s7 = inlined_call_operand.hbm [shape: f32[8,128], index: 7, kind: output, shape index: {0}]
  %s8 = inlined_call_operand.hbm [shape: f32[8,128], index: 8, kind: output, shape index: {1}]
  %9 = xla_tuple %s7, %s8
  %s10 = sld [smem:[#allocation0]]
  $region66: #{tpu_custom_call.1} parent=0
    _
  %s12 = ssub.s32 1, %s10
  %s13 = scalar_select 0, %s12, %s10
  $region1: #{tpu_custom_call.1} parent=0
    #allocation2 [shape = 'u8[4096]{0}', space=vmem, size = 0x1000, scoped, tag = 'input window, operand 0, single buffered']
    #allocation3 [shape = 's32[1]{0}', space=sflag, size = 0x4, scoped, tag = 'scoped memory for tpu_custom_call.1']
    #allocation4 [shape = 's32[1]{0}', space=sflag, size = 0x4, scoped, tag = 'scoped memory for tpu_custom_call.1']
    #allocation5 [shape = 'u8[262144]{0}', space=vmem, size = 0x40000, scoped, tag = 'input window, operand 1, single buffered']
    #allocation6 [shape = 's32[1]{0}', space=sflag, size = 0x4, scoped, tag = 'scoped memory for tpu_custom_call.1']
    #allocation7 [shape = 'u8[2048]{0}', space=vmem, size = 0x800, scoped, tag = 'input window, operand 2, single buffered']
    #allocation8 [shape = 'u8[2048]{0}', space=vmem, size = 0x800, scoped, tag = 'input window, operand 4, single buffered']
    #allocation9 [shape = 's32[1]{0}', space=sflag, size = 0x4, scoped, tag = 'scoped memory for tpu_custom_call.1']
    #allocation10 [shape = 'u8[131072]{0}', space=vmem, size = 0x20000, scoped, tag = 'input window, operand 5, single buffered']
    #allocation11 [shape = 'u8[4096]{0}', space=vmem, size = 0x1000, scoped, tag = 'output window, operand 0, single buffered']
    #allocation12 [shape = 'u8[4096]{0}', space=vmem, size = 0x1000, scoped, tag = 'output window, operand 1, single buffered']
    #allocation13 [shape = 's32[1]{0}', space=sflag, size = 0x4, scoped, tag = 'scoped memory for tpu_custom_call.1']
    %14 = vsyncpa [#allocation3], 0
    %15 = vsyncpa [#allocation6], 0
    %16 = vsyncpa [#allocation9], 0
    %17 = vsyncpa [#allocation4], 0
    %18 = vsyncpa [#allocation13], 0
    // Predicated region
    $region2: #{tpu_custom_call.1} parent=1 // pred_check
      _
    $region3: #{tpu_custom_call.1} parent=1 // pred_check_branch
      %20 = sbr.rel (0) target = $region5
    $region4: #{tpu_custom_call.1} parent=1 // pred_region
      %s22 = ssub.s32 128, 128
      %23 = vsyncadd [#allocation3], %s22
      %s25 = sshll.u32 [#allocation2], 4
      %s26 = int_to_ptr.vmem [resolvable:$true] %s25
      %28 = dma.hbm_to_vmem [thread:$0]  %s0, 128, %s26, [#allocation3]
    $region5: #{tpu_custom_call.1} parent=1 // pred_fallthru
      _
    // Predicated region
    $region6: #{tpu_custom_call.1} parent=1 // pred_check
      _
    $region7: #{tpu_custom_call.1} parent=1 // pred_check_branch
      %30 = sbr.rel (0) target = $region9
    $region8: #{tpu_custom_call.1} parent=1 // pred_region
      %s32 = ssub.s32 8192, 8192
      %33 = vsyncadd [#allocation6], %s32
      %s34 = sshll.u32 [#allocation5], 4
      %s35 = int_to_ptr.vmem [resolvable:$true] %s34
      %40 = dma.hbm_to_vmem [thread:$0]  %s1, 8192, %s35, [#allocation6], 128, 128, 8
    $region9: #{tpu_custom_call.1} parent=1 // pred_fallthru
      _
    // Predicated region
    $region10: #{tpu_custom_call.1} parent=1 // pred_check
      _
    $region11: #{tpu_custom_call.1} parent=1 // pred_check_branch
      %42 = sbr.rel (0) target = $region13
    $region12: #{tpu_custom_call.1} parent=1 // pred_region
      %s44 = ssub.s32 64, 64
      %45 = vsyncadd [#allocation6], %s44
      %s46 = sshll.u32 [#allocation7], 4
      %s47 = int_to_ptr.vmem [resolvable:$true] %s46
      %52 = dma.hbm_to_vmem [thread:$0]  %s2, 64, %s47, [#allocation6], 16, 16, 1
    $region13: #{tpu_custom_call.1} parent=1 // pred_fallthru
      _
    // Predicated region
    $region14: #{tpu_custom_call.1} parent=1 // pred_check
      _
    $region15: #{tpu_custom_call.1} parent=1 // pred_check_branch
      %54 = sbr.rel (0) target = $region17
    $region16: #{tpu_custom_call.1} parent=1 // pred_region
      _
    $region17: #{tpu_custom_call.1} parent=1 // pred_fallthru
      _
    // Predicated region
    $region18: #{tpu_custom_call.1} parent=1 // pred_check
      _
    $region19: #{tpu_custom_call.1} parent=1 // pred_check_branch
      %56 = sbr.rel (0) target = $region21
    $region20: #{tpu_custom_call.1} parent=1 // pred_region
      %s58 = ssub.s32 64, 64
      %59 = vsyncadd [#allocation9], %s58
      %s60 = sshll.u32 [#allocation8], 4
      %s61 = int_to_ptr.vmem [resolvable:$true] %s60
      %66 = dma.hbm_to_vmem [thread:$0]  %s4, 64, %s61, [#allocation9], 16, 16, 1
    $region21: #{tpu_custom_call.1} parent=1 // pred_fallthru
      _
    // Predicated region
    $region22: #{tpu_custom_call.1} parent=1 // pred_check
      _
    $region23: #{tpu_custom_call.1} parent=1 // pred_check_branch
      %68 = sbr.rel (0) target = $region25
    $region24: #{tpu_custom_call.1} parent=1 // pred_region
      %s70 = ssub.s32 4096, 4096
      %71 = vsyncadd [#allocation9], %s70
      %s72 = sshll.u32 [#allocation10], 4
      %s73 = int_to_ptr.vmem [resolvable:$true] %s72
      %78 = dma.hbm_to_vmem [thread:$0]  %s5, 4096, %s73, [#allocation9], 128, 128, 8
    $region25: #{tpu_custom_call.1} parent=1 // pred_fallthru
      _
    // Predicated region
    $region26: #{tpu_custom_call.1} parent=1 // pred_check
      _
    $region27: #{tpu_custom_call.1} parent=1 // pred_check_branch
      %80 = sbr.rel (0) target = $region29
    $region28: #{tpu_custom_call.1} parent=1 // pred_region
      _
    $region29: #{tpu_custom_call.1} parent=1 // pred_fallthru
      _
    // Predicated region
    $region30: #{tpu_custom_call.1} parent=1 // pred_check
      _
    $region31: #{tpu_custom_call.1} parent=1 // pred_check_branch
      %82 = sbr.rel (0) target = $region33
    $region32: #{tpu_custom_call.1} parent=1 // pred_region
      %83 = dma.done [#allocation3], 128
    $region33: #{tpu_custom_call.1} parent=1 // pred_fallthru
      _
    // Predicated region
    $region34: #{tpu_custom_call.1} parent=1 // pred_check
      _
    $region35: #{tpu_custom_call.1} parent=1 // pred_check_branch
      %85 = sbr.rel (0) target = $region37
    $region36: #{tpu_custom_call.1} parent=1 // pred_region
      %86 = dma.done [#allocation6], 8192
    $region37: #{tpu_custom_call.1} parent=1 // pred_fallthru
      _
    // Predicated region
    $region38: #{tpu_custom_call.1} parent=1 // pred_check
      _
    $region39: #{tpu_custom_call.1} parent=1 // pred_check_branch
      %88 = sbr.rel (0) target = $region41
    $region40: #{tpu_custom_call.1} parent=1 // pred_region
      %89 = dma.done [#allocation6], 64
    $region41: #{tpu_custom_call.1} parent=1 // pred_fallthru
      _
    // Predicated region
    $region42: #{tpu_custom_call.1} parent=1 // pred_check
      _
    $region43: #{tpu_custom_call.1} parent=1 // pred_check_branch
      %91 = sbr.rel (0) target = $region45
    $region44: #{tpu_custom_call.1} parent=1 // pred_region
      %92 = dma.done [#allocation9], 64
    $region45: #{tpu_custom_call.1} parent=1 // pred_fallthru
      _
    // Predicated region
    $region46: #{tpu_custom_call.1} parent=1 // pred_check
      _
    $region47: #{tpu_custom_call.1} parent=1 // pred_check_branch
      %94 = sbr.rel (0) target = $region49
    $region48: #{tpu_custom_call.1} parent=1 // pred_region
      %95 = dma.done [#allocation9], 4096
    $region49: #{tpu_custom_call.1} parent=1 // pred_fallthru
      _
    %v96 = vld [vmem:[#allocation2] sm:$0xff]
    %v97 = vld [vmem:[#allocation5] sm:$0xff]
    %v98 = vld [vmem:[#allocation5 + $0x8] sm:$0xff]
    %v99 = vld [vmem:[#allocation5 + $0x10] sm:$0xff]
    %v100 = vld [vmem:[#allocation5 + $0x18] sm:$0xff]
    %v101 = vld [vmem:[#allocation5 + $0x20] sm:$0xff]
    %v102 = vld [vmem:[#allocation5 + $0x28] sm:$0xff]
    %v103 = vld [vmem:[#allocation5 + $0x30] sm:$0xff]
    %v104 = vld [vmem:[#allocation5 + $0x38] sm:$0xff]
    %v105 = vld [vmem:[#allocation5 + $0x40] sm:$0xff]
    %v106 = vld [vmem:[#allocation5 + $0x48] sm:$0xff]
    %v107 = vld [vmem:[#allocation5 + $0x50] sm:$0xff]
    %v108 = vld [vmem:[#allocation5 + $0x58] sm:$0xff]
    %v109 = vld [vmem:[#allocation5 + $0x60] sm:$0xff]
    %v110 = vld [vmem:[#allocation5 + $0x68] sm:$0xff]
    %v111 = vld [vmem:[#allocation5 + $0x70] sm:$0xff]
    %v112 = vld [vmem:[#allocation5 + $0x78] sm:$0xff]
    %v113 = vld [vmem:[#allocation7] sm:$0x1]
    %v115 = vlaneseq
    %v116 = vshrl.u32 %v115, 7
    %v117 = vsub.s32 0, %v116
    %v118 = vrot.slane %v113, %v117
    %120 = vmatprep.subr.mxu0 0.0
    %121 = vmatpush1.msra.mxu0 %v112
    %122 = vmatprep.subr.mxu0 0.0
    %123 = vmatpush1.msra.mxu0 %v111
    %124 = vmatprep.subr.mxu0 0.0
    %125 = vmatpush1.msra.mxu0 %v110
    %126 = vmatprep.subr.mxu0 0.0
    %127 = vmatpush1.msra.mxu0 %v109
    %128 = vmatprep.subr.mxu0 0.0
    %129 = vmatpush1.msra.mxu0 %v108
    %130 = vmatprep.subr.mxu0 0.0
    %131 = vmatpush1.msra.mxu0 %v107
    %132 = vmatprep.subr.mxu0 0.0
    %133 = vmatpush1.msra.mxu0 %v106
    %134 = vmatprep.subr.mxu0 0.0
    %135 = vmatpush1.msra.mxu0 %v105
    %136 = vmatprep.subr.mxu0 0.0
    %137 = vmatpush1.msra.mxu0 %v104
    %138 = vmatprep.subr.mxu0 0.0
    %139 = vmatpush1.msra.mxu0 %v103
    %140 = vmatprep.subr.mxu0 0.0
    %141 = vmatpush1.msra.mxu0 %v102
    %142 = vmatprep.subr.mxu0 0.0
    %143 = vmatpush1.msra.mxu0 %v101
    %144 = vmatprep.subr.mxu0 0.0
    %145 = vmatpush1.msra.mxu0 %v100
    %146 = vmatprep.subr.mxu0 0.0
    %147 = vmatpush1.msra.mxu0 %v99
    %148 = vmatprep.subr.mxu0 0.0
    %149 = vmatpush1.msra.mxu0 %v98
    %150 = vmatprep.subr.mxu0 0.0
    %151 = vmatpush1.msra.mxu0 %v97
    %152 = vmatprep.subr.mxu0 0.0
    %153 = vmatpush2.msra.mxu0 0.0
    %154 = vmatprep.subr.mxu0 0.0
    %155 = vmatpush2.msra.mxu0 0.0
    %156 = vmatprep.subr.mxu0 0.0
    %157 = vmatpush2.msra.mxu0 0.0
    %158 = vmatprep.subr.mxu0 0.0
    %159 = vmatpush2.msra.mxu0 0.0
    %160 = vmatprep.subr.mxu0 0.0
    %161 = vmatpush2.msra.mxu0 0.0
    %162 = vmatprep.subr.mxu0 0.0
    %163 = vmatpush2.msra.mxu0 0.0
    %164 = vmatprep.subr.mxu0 0.0
    %165 = vmatpush2.msra.mxu0 0.0
    %166 = vmatprep.subr.mxu0 0.0
    %167 = vmatpush2.msra.mxu0 0.0
    %168 = vmatprep.subr.mxu0 0.0
    %169 = vmatpush2.msra.mxu0 0.0
    %170 = vmatprep.subr.mxu0 0.0
    %171 = vmatpush2.msra.mxu0 0.0
    %172 = vmatprep.subr.mxu0 0.0
    %173 = vmatpush2.msra.mxu0 0.0
    %174 = vmatprep.subr.mxu0 0.0
    %175 = vmatpush2.msra.mxu0 0.0
    %176 = vmatprep.subr.mxu0 0.0
    %177 = vmatpush2.msra.mxu0 0.0
    %178 = vmatprep.subr.mxu0 0.0
    %179 = vmatpush2.msra.mxu0 0.0
    %180 = vmatprep.subr.mxu0 0.0
    %181 = vmatpush2.msra.mxu0 0.0
    %182 = vmatprep.subr.mxu0 0.0
    %183 = vmatpush2.msra.mxu0 0.0
    %184 = vmatprep.mubr.f32.mxu0 0.0
    %185 = vmatmul.mubr.f32.gmra.mxu0 %v96
    %v186 = vpop.f32.mrf.mxu0
    %v187 = vadd.f32 %v118, %v186
    %v188 = vpop.f32.mrf.mxu0
    %189 = vdwg.mxu0
    %190 = vadd.xlane.f32.xlu0 %v187
    %v191 = vpop.xlane.xlu0 %190
    %v192 = vmul.f32 %v191, 0.015625
    %v193 = vmul.f32 %v187, %v187
    %194 = vadd.xlane.f32.xlu0 %v193
    %v195 = vpop.xlane.xlu0 %194
    %v196 = vmul.f32 %v195, 0.015625
    %v197 = vmul.f32 %v192, %v192
    %v198 = vsub.f32 %v196, %v197
    %v199 = vmax.f32 %v198, 0.0
    %v200 = vsub.f32 %v187, %v192
    %v201 = vadd.f32 %v199, 1e-05
    %v202 = vrsqrt.pop %v201
    %v203 = vmul.f32 %v200, %v202
    %v204 = vld [vmem:[%s3] sm:$0x1]
    %v206 = vlaneseq
    %v207 = vshrl.u32 %v206, 7
    %v208 = vsub.s32 0, %v207
    %v209 = vrot.slane %v204, %v208
    %v211 = vmul.f32 %v203, %v209
    %v212 = vld [vmem:[#allocation8] sm:$0x1]
    %v214 = vlaneseq
    %v215 = vshrl.u32 %v214, 7
    %v216 = vsub.s32 0, %v215
    %v217 = vrot.slane %v212, %v216
    %v219 = vadd.f32 %v211, %v217
    %v220 = vxor.u32 %v219, 2147483648
    %v221 = vmul.f32 %v220, 1.442695
    %v222 = vpow.pop %v221
    %v223 = vadd.f32 %v222, 1.0
    %v224 = vrcp.pop %v223
    %v225 = vmul.f32 1.0, %v224
    %v226 = vmul.f32 %v219, %v225
    %s227 = scalar_lea.vmem [#allocation5], 128
    %v228 = vld [vmem:[%s227] sm:$0xff]
    %v229 = vld [vmem:[%s227 + $0x8] sm:$0xff]
    %v230 = vld [vmem:[%s227 + $0x10] sm:$0xff]
    %v231 = vld [vmem:[%s227 + $0x18] sm:$0xff]
    %v232 = vld [vmem:[%s227 + $0x20] sm:$0xff]
    %v233 = vld [vmem:[%s227 + $0x28] sm:$0xff]
    %v234 = vld [vmem:[%s227 + $0x30] sm:$0xff]
    %v235 = vld [vmem:[%s227 + $0x38] sm:$0xff]
    %v236 = vld [vmem:[%s227 + $0x40] sm:$0xff]
    %v237 = vld [vmem:[%s227 + $0x48] sm:$0xff]
    %v238 = vld [vmem:[%s227 + $0x50] sm:$0xff]
    %v239 = vld [vmem:[%s227 + $0x58] sm:$0xff]
    %v240 = vld [vmem:[%s227 + $0x60] sm:$0xff]
    %v241 = vld [vmem:[%s227 + $0x68] sm:$0xff]
    %v242 = vld [vmem:[%s227 + $0x70] sm:$0xff]
    %v243 = vld [vmem:[%s227 + $0x78] sm:$0xff]
    %s244 = scalar_lea.vmem [#allocation7], 1
    %v245 = vld [vmem:[%s244] sm:$0x1]
    %v247 = vlaneseq
    %v248 = vshrl.u32 %v247, 7
    %v249 = vsub.s32 0, %v248
    %v250 = vrot.slane %v245, %v249
    %252 = vmatprep.subr.mxu0 0.0
    %253 = vmatpush1.msra.mxu0 %v243
    %254 = vmatprep.subr.mxu0 0.0
    %255 = vmatpush1.msra.mxu0 %v242
    %256 = vmatprep.subr.mxu0 0.0
    %257 = vmatpush1.msra.mxu0 %v241
    %258 = vmatprep.subr.mxu0 0.0
    %259 = vmatpush1.msra.mxu0 %v240
    %260 = vmatprep.subr.mxu0 0.0
    %261 = vmatpush1.msra.mxu0 %v239
    %262 = vmatprep.subr.mxu0 0.0
    %263 = vmatpush1.msra.mxu0 %v238
    %264 = vmatprep.subr.mxu0 0.0
    %265 = vmatpush1.msra.mxu0 %v237
    %266 = vmatprep.subr.mxu0 0.0
    %267 = vmatpush1.msra.mxu0 %v236
    %268 = vmatprep.subr.mxu0 0.0
    %269 = vmatpush1.msra.mxu0 %v235
    %270 = vmatprep.subr.mxu0 0.0
    %271 = vmatpush1.msra.mxu0 %v234
    %272 = vmatprep.subr.mxu0 0.0
    %273 = vmatpush1.msra.mxu0 %v233
    %274 = vmatprep.subr.mxu0 0.0
    %275 = vmatpush1.msra.mxu0 %v232
    %276 = vmatprep.subr.mxu0 0.0
    %277 = vmatpush1.msra.mxu0 %v231
    %278 = vmatprep.subr.mxu0 0.0
    %279 = vmatpush1.msra.mxu0 %v230
    %280 = vmatprep.subr.mxu0 0.0
    %281 = vmatpush1.msra.mxu0 %v229
    %282 = vmatprep.subr.mxu0 0.0
    %283 = vmatpush1.msra.mxu0 %v228
    %284 = vmatprep.subr.mxu0 0.0
    %285 = vmatpush2.msra.mxu0 0.0
    %286 = vmatprep.subr.mxu0 0.0
    %287 = vmatpush2.msra.mxu0 0.0
    %288 = vmatprep.subr.mxu0 0.0
    %289 = vmatpush2.msra.mxu0 0.0
    %290 = vmatprep.subr.mxu0 0.0
    %291 = vmatpush2.msra.mxu0 0.0
    %292 = vmatprep.subr.mxu0 0.0
    %293 = vmatpush2.msra.mxu0 0.0
    %294 = vmatprep.subr.mxu0 0.0
    %295 = vmatpush2.msra.mxu0 0.0
    %296 = vmatprep.subr.mxu0 0.0
    %297 = vmatpush2.msra.mxu0 0.0
    %298 = vmatprep.subr.mxu0 0.0
    %299 = vmatpush2.msra.mxu0 0.0
    %300 = vmatprep.subr.mxu0 0.0
    %301 = vmatpush2.msra.mxu0 0.0
    %302 = vmatprep.subr.mxu0 0.0
    %303 = vmatpush2.msra.mxu0 0.0
    %304 = vmatprep.subr.mxu0 0.0
    %305 = vmatpush2.msra.mxu0 0.0
    %306 = vmatprep.subr.mxu0 0.0
    %307 = vmatpush2.msra.mxu0 0.0
    %308 = vmatprep.subr.mxu0 0.0
    %309 = vmatpush2.msra.mxu0 0.0
    %310 = vmatprep.subr.mxu0 0.0
    %311 = vmatpush2.msra.mxu0 0.0
    %312 = vmatprep.subr.mxu0 0.0
    %313 = vmatpush2.msra.mxu0 0.0
    %314 = vmatprep.subr.mxu0 0.0
    %315 = vmatpush2.msra.mxu0 0.0
    %316 = vmatprep.mubr.f32.mxu0 0.0
    %317 = vmatmul.mubr.f32.gmra.mxu0 %v226
    %v318 = vpop.f32.mrf.mxu0
    %v319 = vadd.f32 %v250, %v318
    %v320 = vpop.f32.mrf.mxu0
    %321 = vdwg.mxu0
    %322 = vadd.xlane.f32.xlu0 %v319
    %v323 = vpop.xlane.xlu0 %322
    %v324 = vmul.f32 %v323, 0.015625
    %v325 = vmul.f32 %v319, %v319
    %326 = vadd.xlane.f32.xlu0 %v325
    %v327 = vpop.xlane.xlu0 %326
    %v328 = vmul.f32 %v327, 0.015625
    %v329 = vmul.f32 %v324, %v324
    %v330 = vsub.f32 %v328, %v329
    %v331 = vmax.f32 %v330, 0.0
    %v332 = vsub.f32 %v319, %v324
    %v333 = vadd.f32 %v331, 1e-05
    %v334 = vrsqrt.pop %v333
    %v335 = vmul.f32 %v332, %v334
    %s336 = scalar_lea.vmem %s3, 1
    %v337 = vld [vmem:[%s336] sm:$0x1]
    %v339 = vlaneseq
    %v340 = vshrl.u32 %v339, 7
    %v341 = vsub.s32 0, %v340
    %v342 = vrot.slane %v337, %v341
    %v344 = vmul.f32 %v335, %v342
    %s345 = scalar_lea.vmem [#allocation8], 1
    %v346 = vld [vmem:[%s345] sm:$0x1]
    %v348 = vlaneseq
    %v349 = vshrl.u32 %v348, 7
    %v350 = vsub.s32 0, %v349
    %v351 = vrot.slane %v346, %v350
    %v353 = vadd.f32 %v344, %v351
    %v354 = vxor.u32 %v353, 2147483648
    %v355 = vmul.f32 %v354, 1.442695
    %v356 = vpow.pop %v355
    %v357 = vadd.f32 %v356, 1.0
    %v358 = vrcp.pop %v357
    %v359 = vmul.f32 1.0, %v358
    %v360 = vmul.f32 %v353, %v359
    %v361 = vld [vmem:[#allocation10] sm:$0xff]
    %v362 = vld [vmem:[#allocation10 + $0x8] sm:$0xff]
    %v363 = vld [vmem:[#allocation10 + $0x10] sm:$0xff]
    %v364 = vld [vmem:[#allocation10 + $0x18] sm:$0xff]
    %v365 = vld [vmem:[#allocation10 + $0x20] sm:$0xff]
    %v366 = vld [vmem:[#allocation10 + $0x28] sm:$0xff]
    %v367 = vld [vmem:[#allocation10 + $0x30] sm:$0xff]
    %v368 = vld [vmem:[#allocation10 + $0x38] sm:$0xff]
    %v369 = vld [vmem:[#allocation10 + $0x40] sm:$0xff]
    %v370 = vld [vmem:[#allocation10 + $0x48] sm:$0xff]
    %v371 = vld [vmem:[#allocation10 + $0x50] sm:$0xff]
    %v372 = vld [vmem:[#allocation10 + $0x58] sm:$0xff]
    %v373 = vld [vmem:[#allocation10 + $0x60] sm:$0xff]
    %v374 = vld [vmem:[#allocation10 + $0x68] sm:$0xff]
    %v375 = vld [vmem:[#allocation10 + $0x70] sm:$0xff]
    %v376 = vld [vmem:[#allocation10 + $0x78] sm:$0xff]
    %v377 = vld [vmem:[%s6] sm:$0x1]
    %v379 = vlaneseq
    %v380 = vshrl.u32 %v379, 7
    %v381 = vsub.s32 0, %v380
    %v382 = vrot.slane %v377, %v381
    %384 = vmatprep.subr.mxu0 0.0
    %385 = vmatpush1.msra.mxu0 %v376
    %386 = vmatprep.subr.mxu0 0.0
    %387 = vmatpush1.msra.mxu0 %v375
    %388 = vmatprep.subr.mxu0 0.0
    %389 = vmatpush1.msra.mxu0 %v374
    %390 = vmatprep.subr.mxu0 0.0
    %391 = vmatpush1.msra.mxu0 %v373
    %392 = vmatprep.subr.mxu0 0.0
    %393 = vmatpush1.msra.mxu0 %v372
    %394 = vmatprep.subr.mxu0 0.0
    %395 = vmatpush1.msra.mxu0 %v371
    %396 = vmatprep.subr.mxu0 0.0
    %397 = vmatpush1.msra.mxu0 %v370
    %398 = vmatprep.subr.mxu0 0.0
    %399 = vmatpush1.msra.mxu0 %v369
    %400 = vmatprep.subr.mxu0 0.0
    %401 = vmatpush1.msra.mxu0 %v368
    %402 = vmatprep.subr.mxu0 0.0
    %403 = vmatpush1.msra.mxu0 %v367
    %404 = vmatprep.subr.mxu0 0.0
    %405 = vmatpush1.msra.mxu0 %v366
    %406 = vmatprep.subr.mxu0 0.0
    %407 = vmatpush1.msra.mxu0 %v365
    %408 = vmatprep.subr.mxu0 0.0
    %409 = vmatpush1.msra.mxu0 %v364
    %410 = vmatprep.subr.mxu0 0.0
    %411 = vmatpush1.msra.mxu0 %v363
    %412 = vmatprep.subr.mxu0 0.0
    %413 = vmatpush1.msra.mxu0 %v362
    %414 = vmatprep.subr.mxu0 0.0
    %415 = vmatpush1.msra.mxu0 %v361
    %416 = vmatprep.subr.mxu0 0.0
    %417 = vmatpush2.msra.mxu0 0.0
    %418 = vmatprep.subr.mxu0 0.0
    %419 = vmatpush2.msra.mxu0 0.0
    %420 = vmatprep.subr.mxu0 0.0
    %421 = vmatpush2.msra.mxu0 0.0
    %422 = vmatprep.subr.mxu0 0.0
    %423 = vmatpush2.msra.mxu0 0.0
    %424 = vmatprep.subr.mxu0 0.0
    %425 = vmatpush2.msra.mxu0 0.0
    %426 = vmatprep.subr.mxu0 0.0
    %427 = vmatpush2.msra.mxu0 0.0
    %428 = vmatprep.subr.mxu0 0.0
    %429 = vmatpush2.msra.mxu0 0.0
    %430 = vmatprep.subr.mxu0 0.0
    %431 = vmatpush2.msra.mxu0 0.0
    %432 = vmatprep.subr.mxu0 0.0
    %433 = vmatpush2.msra.mxu0 0.0
    %434 = vmatprep.subr.mxu0 0.0
    %435 = vmatpush2.msra.mxu0 0.0
    %436 = vmatprep.subr.mxu0 0.0
    %437 = vmatpush2.msra.mxu0 0.0
    %438 = vmatprep.subr.mxu0 0.0
    %439 = vmatpush2.msra.mxu0 0.0
    %440 = vmatprep.subr.mxu0 0.0
    %441 = vmatpush2.msra.mxu0 0.0
    %442 = vmatprep.subr.mxu0 0.0
    %443 = vmatpush2.msra.mxu0 0.0
    %444 = vmatprep.subr.mxu0 0.0
    %445 = vmatpush2.msra.mxu0 0.0
    %446 = vmatprep.subr.mxu0 0.0
    %447 = vmatpush2.msra.mxu0 0.0
    %448 = vmatprep.mubr.f32.mxu0 0.0
    %449 = vmatmul.mubr.f32.gmra.mxu0 %v360
    %v450 = vpop.f32.mrf.mxu0
    %v451 = vadd.f32 %v382, %v450
    %v452 = vpop.f32.mrf.mxu0
    %453 = vdwg.mxu0
    %454 = vst [vmem:[#allocation11] sm:$0xff] %v451
    %s455 = scalar_lea.vmem [#allocation5], 256
    %v456 = vld [vmem:[%s455] sm:$0xff]
    %v457 = vld [vmem:[%s455 + $0x8] sm:$0xff]
    %v458 = vld [vmem:[%s455 + $0x10] sm:$0xff]
    %v459 = vld [vmem:[%s455 + $0x18] sm:$0xff]
    %v460 = vld [vmem:[%s455 + $0x20] sm:$0xff]
    %v461 = vld [vmem:[%s455 + $0x28] sm:$0xff]
    %v462 = vld [vmem:[%s455 + $0x30] sm:$0xff]
    %v463 = vld [vmem:[%s455 + $0x38] sm:$0xff]
    %v464 = vld [vmem:[%s455 + $0x40] sm:$0xff]
    %v465 = vld [vmem:[%s455 + $0x48] sm:$0xff]
    %v466 = vld [vmem:[%s455 + $0x50] sm:$0xff]
    %v467 = vld [vmem:[%s455 + $0x58] sm:$0xff]
    %v468 = vld [vmem:[%s455 + $0x60] sm:$0xff]
    %v469 = vld [vmem:[%s455 + $0x68] sm:$0xff]
    %v470 = vld [vmem:[%s455 + $0x70] sm:$0xff]
    %v471 = vld [vmem:[%s455 + $0x78] sm:$0xff]
    %s472 = scalar_lea.vmem [#allocation7], 2
    %v473 = vld [vmem:[%s472] sm:$0x1]
    %v475 = vlaneseq
    %v476 = vshrl.u32 %v475, 7
    %v477 = vsub.s32 0, %v476
    %v478 = vrot.slane %v473, %v477
    %480 = vmatprep.subr.mxu0 0.0
    %481 = vmatpush1.msra.mxu0 %v471
    %482 = vmatprep.subr.mxu0 0.0
    %483 = vmatpush1.msra.mxu0 %v470
    %484 = vmatprep.subr.mxu0 0.0
    %485 = vmatpush1.msra.mxu0 %v469
    %486 = vmatprep.subr.mxu0 0.0
    %487 = vmatpush1.msra.mxu0 %v468
    %488 = vmatprep.subr.mxu0 0.0
    %489 = vmatpush1.msra.mxu0 %v467
    %490 = vmatprep.subr.mxu0 0.0
    %491 = vmatpush1.msra.mxu0 %v466
    %492 = vmatprep.subr.mxu0 0.0
    %493 = vmatpush1.msra.mxu0 %v465
    %494 = vmatprep.subr.mxu0 0.0
    %495 = vmatpush1.msra.mxu0 %v464
    %496 = vmatprep.subr.mxu0 0.0
    %497 = vmatpush1.msra.mxu0 %v463
    %498 = vmatprep.subr.mxu0 0.0
    %499 = vmatpush1.msra.mxu0 %v462
    %500 = vmatprep.subr.mxu0 0.0
    %501 = vmatpush1.msra.mxu0 %v461
    %502 = vmatprep.subr.mxu0 0.0
    %503 = vmatpush1.msra.mxu0 %v460
    %504 = vmatprep.subr.mxu0 0.0
    %505 = vmatpush1.msra.mxu0 %v459
    %506 = vmatprep.subr.mxu0 0.0
    %507 = vmatpush1.msra.mxu0 %v458
    %508 = vmatprep.subr.mxu0 0.0
    %509 = vmatpush1.msra.mxu0 %v457
    %510 = vmatprep.subr.mxu0 0.0
    %511 = vmatpush1.msra.mxu0 %v456
    %512 = vmatprep.subr.mxu0 0.0
    %513 = vmatpush2.msra.mxu0 0.0
    %514 = vmatprep.subr.mxu0 0.0
    %515 = vmatpush2.msra.mxu0 0.0
    %516 = vmatprep.subr.mxu0 0.0
    %517 = vmatpush2.msra.mxu0 0.0
    %518 = vmatprep.subr.mxu0 0.0
    %519 = vmatpush2.msra.mxu0 0.0
    %520 = vmatprep.subr.mxu0 0.0
    %521 = vmatpush2.msra.mxu0 0.0
    %522 = vmatprep.subr.mxu0 0.0
    %523 = vmatpush2.msra.mxu0 0.0
    %524 = vmatprep.subr.mxu0 0.0
    %525 = vmatpush2.msra.mxu0 0.0
    %526 = vmatprep.subr.mxu0 0.0
    %527 = vmatpush2.msra.mxu0 0.0
    %528 = vmatprep.subr.mxu0 0.0
    %529 = vmatpush2.msra.mxu0 0.0
    %530 = vmatprep.subr.mxu0 0.0
    %531 = vmatpush2.msra.mxu0 0.0
    %532 = vmatprep.subr.mxu0 0.0
    %533 = vmatpush2.msra.mxu0 0.0
    %534 = vmatprep.subr.mxu0 0.0
    %535 = vmatpush2.msra.mxu0 0.0
    %536 = vmatprep.subr.mxu0 0.0
    %537 = vmatpush2.msra.mxu0 0.0
    %538 = vmatprep.subr.mxu0 0.0
    %539 = vmatpush2.msra.mxu0 0.0
    %540 = vmatprep.subr.mxu0 0.0
    %541 = vmatpush2.msra.mxu0 0.0
    %542 = vmatprep.subr.mxu0 0.0
    %543 = vmatpush2.msra.mxu0 0.0
    %544 = vmatprep.mubr.f32.mxu0 0.0
    %545 = vmatmul.mubr.f32.gmra.mxu0 %v96
    %v546 = vpop.f32.mrf.mxu0
    %v547 = vadd.f32 %v478, %v546
    %v548 = vpop.f32.mrf.mxu0
    %549 = vdwg.mxu0
    %550 = vadd.xlane.f32.xlu0 %v547
    %v551 = vpop.xlane.xlu0 %550
    %v552 = vmul.f32 %v551, 0.015625
    %v553 = vmul.f32 %v547, %v547
    %554 = vadd.xlane.f32.xlu0 %v553
    %v555 = vpop.xlane.xlu0 %554
    %v556 = vmul.f32 %v555, 0.015625
    %v557 = vmul.f32 %v552, %v552
    %v558 = vsub.f32 %v556, %v557
    %v559 = vmax.f32 %v558, 0.0
    %v560 = vsub.f32 %v547, %v552
    %v561 = vadd.f32 %v559, 1e-05
    %v562 = vrsqrt.pop %v561
    %v563 = vmul.f32 %v560, %v562
    %s564 = scalar_lea.vmem %s3, 2
    %v565 = vld [vmem:[%s564] sm:$0x1]
    %v567 = vlaneseq
    %v568 = vshrl.u32 %v567, 7
    %v569 = vsub.s32 0, %v568
    %v570 = vrot.slane %v565, %v569
    %v572 = vmul.f32 %v563, %v570
    %s573 = scalar_lea.vmem [#allocation8], 2
    %v574 = vld [vmem:[%s573] sm:$0x1]
    %v576 = vlaneseq
    %v577 = vshrl.u32 %v576, 7
    %v578 = vsub.s32 0, %v577
    %v579 = vrot.slane %v574, %v578
    %v581 = vadd.f32 %v572, %v579
    %v582 = vxor.u32 %v581, 2147483648
    %v583 = vmul.f32 %v582, 1.442695
    %v584 = vpow.pop %v583
    %v585 = vadd.f32 %v584, 1.0
    %v586 = vrcp.pop %v585
    %v587 = vmul.f32 1.0, %v586
    %v588 = vmul.f32 %v581, %v587
    %s589 = scalar_lea.vmem [#allocation5], 384
    %v590 = vld [vmem:[%s589] sm:$0xff]
    %v591 = vld [vmem:[%s589 + $0x8] sm:$0xff]
    %v592 = vld [vmem:[%s589 + $0x10] sm:$0xff]
    %v593 = vld [vmem:[%s589 + $0x18] sm:$0xff]
    %v594 = vld [vmem:[%s589 + $0x20] sm:$0xff]
    %v595 = vld [vmem:[%s589 + $0x28] sm:$0xff]
    %v596 = vld [vmem:[%s589 + $0x30] sm:$0xff]
    %v597 = vld [vmem:[%s589 + $0x38] sm:$0xff]
    %v598 = vld [vmem:[%s589 + $0x40] sm:$0xff]
    %v599 = vld [vmem:[%s589 + $0x48] sm:$0xff]
    %v600 = vld [vmem:[%s589 + $0x50] sm:$0xff]
    %v601 = vld [vmem:[%s589 + $0x58] sm:$0xff]
    %v602 = vld [vmem:[%s589 + $0x60] sm:$0xff]
    %v603 = vld [vmem:[%s589 + $0x68] sm:$0xff]
    %v604 = vld [vmem:[%s589 + $0x70] sm:$0xff]
    %v605 = vld [vmem:[%s589 + $0x78] sm:$0xff]
    %s606 = scalar_lea.vmem [#allocation7], 3
    %v607 = vld [vmem:[%s606] sm:$0x1]
    %v609 = vlaneseq
    %v610 = vshrl.u32 %v609, 7
    %v611 = vsub.s32 0, %v610
    %v612 = vrot.slane %v607, %v611
    %614 = vmatprep.subr.mxu0 0.0
    %615 = vmatpush1.msra.mxu0 %v605
    %616 = vmatprep.subr.mxu0 0.0
    %617 = vmatpush1.msra.mxu0 %v604
    %618 = vmatprep.subr.mxu0 0.0
    %619 = vmatpush1.msra.mxu0 %v603
    %620 = vmatprep.subr.mxu0 0.0
    %621 = vmatpush1.msra.mxu0 %v602
    %622 = vmatprep.subr.mxu0 0.0
    %623 = vmatpush1.msra.mxu0 %v601
    %624 = vmatprep.subr.mxu0 0.0
    %625 = vmatpush1.msra.mxu0 %v600
    %626 = vmatprep.subr.mxu0 0.0
    %627 = vmatpush1.msra.mxu0 %v599
    %628 = vmatprep.subr.mxu0 0.0
    %629 = vmatpush1.msra.mxu0 %v598
    %630 = vmatprep.subr.mxu0 0.0
    %631 = vmatpush1.msra.mxu0 %v597
    %632 = vmatprep.subr.mxu0 0.0
    %633 = vmatpush1.msra.mxu0 %v596
    %634 = vmatprep.subr.mxu0 0.0
    %635 = vmatpush1.msra.mxu0 %v595
    %636 = vmatprep.subr.mxu0 0.0
    %637 = vmatpush1.msra.mxu0 %v594
    %638 = vmatprep.subr.mxu0 0.0
    %639 = vmatpush1.msra.mxu0 %v593
    %640 = vmatprep.subr.mxu0 0.0
    %641 = vmatpush1.msra.mxu0 %v592
    %642 = vmatprep.subr.mxu0 0.0
    %643 = vmatpush1.msra.mxu0 %v591
    %644 = vmatprep.subr.mxu0 0.0
    %645 = vmatpush1.msra.mxu0 %v590
    %646 = vmatprep.subr.mxu0 0.0
    %647 = vmatpush2.msra.mxu0 0.0
    %648 = vmatprep.subr.mxu0 0.0
    %649 = vmatpush2.msra.mxu0 0.0
    %650 = vmatprep.subr.mxu0 0.0
    %651 = vmatpush2.msra.mxu0 0.0
    %652 = vmatprep.subr.mxu0 0.0
    %653 = vmatpush2.msra.mxu0 0.0
    %654 = vmatprep.subr.mxu0 0.0
    %655 = vmatpush2.msra.mxu0 0.0
    %656 = vmatprep.subr.mxu0 0.0
    %657 = vmatpush2.msra.mxu0 0.0
    %658 = vmatprep.subr.mxu0 0.0
    %659 = vmatpush2.msra.mxu0 0.0
    %660 = vmatprep.subr.mxu0 0.0
    %661 = vmatpush2.msra.mxu0 0.0
    %662 = vmatprep.subr.mxu0 0.0
    %663 = vmatpush2.msra.mxu0 0.0
    %664 = vmatprep.subr.mxu0 0.0
    %665 = vmatpush2.msra.mxu0 0.0
    %666 = vmatprep.subr.mxu0 0.0
    %667 = vmatpush2.msra.mxu0 0.0
    %668 = vmatprep.subr.mxu0 0.0
    %669 = vmatpush2.msra.mxu0 0.0
    %670 = vmatprep.subr.mxu0 0.0
    %671 = vmatpush2.msra.mxu0 0.0
    %672 = vmatprep.subr.mxu0 0.0
    %673 = vmatpush2.msra.mxu0 0.0
    %674 = vmatprep.subr.mxu0 0.0
    %675 = vmatpush2.msra.mxu0 0.0
    %676 = vmatprep.subr.mxu0 0.0
    %677 = vmatpush2.msra.mxu0 0.0
    %678 = vmatprep.mubr.f32.mxu0 0.0
    %679 = vmatmul.mubr.f32.gmra.mxu0 %v588
    %v680 = vpop.f32.mrf.mxu0
    %v681 = vadd.f32 %v612, %v680
    %v682 = vpop.f32.mrf.mxu0
    %683 = vdwg.mxu0
    %684 = vadd.xlane.f32.xlu0 %v681
    %v685 = vpop.xlane.xlu0 %684
    %v686 = vmul.f32 %v685, 0.015625
    %v687 = vmul.f32 %v681, %v681
    %688 = vadd.xlane.f32.xlu0 %v687
    %v689 = vpop.xlane.xlu0 %688
    %v690 = vmul.f32 %v689, 0.015625
    %v691 = vmul.f32 %v686, %v686
    %v692 = vsub.f32 %v690, %v691
    %v693 = vmax.f32 %v692, 0.0
    %v694 = vsub.f32 %v681, %v686
    %v695 = vadd.f32 %v693, 1e-05
    %v696 = vrsqrt.pop %v695
    %v697 = vmul.f32 %v694, %v696
    %s698 = scalar_lea.vmem %s3, 3
    %v699 = vld [vmem:[%s698] sm:$0x1]
    %v701 = vlaneseq
    %v702 = vshrl.u32 %v701, 7
    %v703 = vsub.s32 0, %v702
    %v704 = vrot.slane %v699, %v703
    %v706 = vmul.f32 %v697, %v704
    %s707 = scalar_lea.vmem [#allocation8], 3
    %v708 = vld [vmem:[%s707] sm:$0x1]
    %v710 = vlaneseq
    %v711 = vshrl.u32 %v710, 7
    %v712 = vsub.s32 0, %v711
    %v713 = vrot.slane %v708, %v712
    %v715 = vadd.f32 %v706, %v713
    %v716 = vxor.u32 %v715, 2147483648
    %v717 = vmul.f32 %v716, 1.442695
    %v718 = vpow.pop %v717
    %v719 = vadd.f32 %v718, 1.0
    %v720 = vrcp.pop %v719
    %v721 = vmul.f32 1.0, %v720
    %v722 = vmul.f32 %v715, %v721
    %s723 = scalar_lea.vmem [#allocation10], 128
    %v724 = vld [vmem:[%s723] sm:$0xff]
    %v725 = vld [vmem:[%s723 + $0x8] sm:$0xff]
    %v726 = vld [vmem:[%s723 + $0x10] sm:$0xff]
    %v727 = vld [vmem:[%s723 + $0x18] sm:$0xff]
    %v728 = vld [vmem:[%s723 + $0x20] sm:$0xff]
    %v729 = vld [vmem:[%s723 + $0x28] sm:$0xff]
    %v730 = vld [vmem:[%s723 + $0x30] sm:$0xff]
    %v731 = vld [vmem:[%s723 + $0x38] sm:$0xff]
    %v732 = vld [vmem:[%s723 + $0x40] sm:$0xff]
    %v733 = vld [vmem:[%s723 + $0x48] sm:$0xff]
    %v734 = vld [vmem:[%s723 + $0x50] sm:$0xff]
    %v735 = vld [vmem:[%s723 + $0x58] sm:$0xff]
    %v736 = vld [vmem:[%s723 + $0x60] sm:$0xff]
    %v737 = vld [vmem:[%s723 + $0x68] sm:$0xff]
    %v738 = vld [vmem:[%s723 + $0x70] sm:$0xff]
    %v739 = vld [vmem:[%s723 + $0x78] sm:$0xff]
    %s740 = scalar_lea.vmem %s6, 1
    %v741 = vld [vmem:[%s740] sm:$0x1]
    %v743 = vlaneseq
    %v744 = vshrl.u32 %v743, 7
    %v745 = vsub.s32 0, %v744
    %v746 = vrot.slane %v741, %v745
    %748 = vmatprep.subr.mxu0 0.0
    %749 = vmatpush1.msra.mxu0 %v739
    %750 = vmatprep.subr.mxu0 0.0
    %751 = vmatpush1.msra.mxu0 %v738
    %752 = vmatprep.subr.mxu0 0.0
    %753 = vmatpush1.msra.mxu0 %v737
    %754 = vmatprep.subr.mxu0 0.0
    %755 = vmatpush1.msra.mxu0 %v736
    %756 = vmatprep.subr.mxu0 0.0
    %757 = vmatpush1.msra.mxu0 %v735
    %758 = vmatprep.subr.mxu0 0.0
    %759 = vmatpush1.msra.mxu0 %v734
    %760 = vmatprep.subr.mxu0 0.0
    %761 = vmatpush1.msra.mxu0 %v733
    %762 = vmatprep.subr.mxu0 0.0
    %763 = vmatpush1.msra.mxu0 %v732
    %764 = vmatprep.subr.mxu0 0.0
    %765 = vmatpush1.msra.mxu0 %v731
    %766 = vmatprep.subr.mxu0 0.0
    %767 = vmatpush1.msra.mxu0 %v730
    %768 = vmatprep.subr.mxu0 0.0
    %769 = vmatpush1.msra.mxu0 %v729
    %770 = vmatprep.subr.mxu0 0.0
    %771 = vmatpush1.msra.mxu0 %v728
    %772 = vmatprep.subr.mxu0 0.0
    %773 = vmatpush1.msra.mxu0 %v727
    %774 = vmatprep.subr.mxu0 0.0
    %775 = vmatpush1.msra.mxu0 %v726
    %776 = vmatprep.subr.mxu0 0.0
    %777 = vmatpush1.msra.mxu0 %v725
    %778 = vmatprep.subr.mxu0 0.0
    %779 = vmatpush1.msra.mxu0 %v724
    %780 = vmatprep.subr.mxu0 0.0
    %781 = vmatpush2.msra.mxu0 0.0
    %782 = vmatprep.subr.mxu0 0.0
    %783 = vmatpush2.msra.mxu0 0.0
    %784 = vmatprep.subr.mxu0 0.0
    %785 = vmatpush2.msra.mxu0 0.0
    %786 = vmatprep.subr.mxu0 0.0
    %787 = vmatpush2.msra.mxu0 0.0
    %788 = vmatprep.subr.mxu0 0.0
    %789 = vmatpush2.msra.mxu0 0.0
    %790 = vmatprep.subr.mxu0 0.0
    %791 = vmatpush2.msra.mxu0 0.0
    %792 = vmatprep.subr.mxu0 0.0
    %793 = vmatpush2.msra.mxu0 0.0
    %794 = vmatprep.subr.mxu0 0.0
    %795 = vmatpush2.msra.mxu0 0.0
    %796 = vmatprep.subr.mxu0 0.0
    %797 = vmatpush2.msra.mxu0 0.0
    %798 = vmatprep.subr.mxu0 0.0
    %799 = vmatpush2.msra.mxu0 0.0
    %800 = vmatprep.subr.mxu0 0.0
    %801 = vmatpush2.msra.mxu0 0.0
    %802 = vmatprep.subr.mxu0 0.0
    %803 = vmatpush2.msra.mxu0 0.0
    %804 = vmatprep.subr.mxu0 0.0
    %805 = vmatpush2.msra.mxu0 0.0
    %806 = vmatprep.subr.mxu0 0.0
    %807 = vmatpush2.msra.mxu0 0.0
    %808 = vmatprep.subr.mxu0 0.0
    %809 = vmatpush2.msra.mxu0 0.0
    %810 = vmatprep.subr.mxu0 0.0
    %811 = vmatpush2.msra.mxu0 0.0
    %812 = vmatprep.mubr.f32.mxu0 0.0
    %813 = vmatmul.mubr.f32.gmra.mxu0 %v722
    %v814 = vpop.f32.mrf.mxu0
    %v815 = vadd.f32 %v746, %v814
    %v816 = vpop.f32.mrf.mxu0
    %817 = vdwg.mxu0
    %v818 = vxor.u32 %v815, 2147483648
    %v819 = vmul.f32 %v818, 1.442695
    %v820 = vpow.pop %v819
    %v821 = vadd.f32 %v820, 1.0
    %v822 = vrcp.pop %v821
    %v823 = vmul.f32 1.0, %v822
    %824 = vst [vmem:[#allocation12] sm:$0xff] %v823
    // Predicated region
    $region50: #{tpu_custom_call.1} parent=1 // pred_check
      _
    $region51: #{tpu_custom_call.1} parent=1 // pred_check_branch
      %826 = sbr.rel (0) target = $region53
    $region52: #{tpu_custom_call.1} parent=1 // pred_region
      %s828 = ssub.s32 128, 128
      %829 = vsyncadd [#allocation4], %s828
      %s831 = sshll.u32 [#allocation11], 4
      %s832 = int_to_ptr.vmem [resolvable:$true] %s831
      %834 = dma.vmem_to_hbm [thread:$0]  %s832, 128, %s7, [#allocation4]
    $region53: #{tpu_custom_call.1} parent=1 // pred_fallthru
      _
    // Predicated region
    $region54: #{tpu_custom_call.1} parent=1 // pred_check
      _
    $region55: #{tpu_custom_call.1} parent=1 // pred_check_branch
      %836 = sbr.rel (0) target = $region57
    $region56: #{tpu_custom_call.1} parent=1 // pred_region
      %s838 = ssub.s32 128, 128
      %839 = vsyncadd [#allocation13], %s838
      %s841 = sshll.u32 [#allocation12], 4
      %s842 = int_to_ptr.vmem [resolvable:$true] %s841
      %844 = dma.vmem_to_hbm [thread:$0]  %s842, 128, %s8, [#allocation13]
    $region57: #{tpu_custom_call.1} parent=1 // pred_fallthru
      _
    // Predicated region
    $region58: #{tpu_custom_call.1} parent=1 // pred_check
      _
    $region59: #{tpu_custom_call.1} parent=1 // pred_check_branch
      %846 = sbr.rel (0) target = $region61
    $region60: #{tpu_custom_call.1} parent=1 // pred_region
      %847 = dma.done [#allocation4], 128
    $region61: #{tpu_custom_call.1} parent=1 // pred_fallthru
      _
    // Predicated region
    $region62: #{tpu_custom_call.1} parent=1 // pred_check
      _
    $region63: #{tpu_custom_call.1} parent=1 // pred_check_branch
      %849 = sbr.rel (0) target = $region65
    $region64: #{tpu_custom_call.1} parent=1 // pred_region
      %850 = dma.done [#allocation13], 128
    $region65: #{tpu_custom_call.1} parent=1 // pred_fallthru
      _
    %851 = vsyncpa [#allocation3], 1
    %852 = vsyncpa [#allocation6], 1
    %853 = vsyncpa [#allocation9], 1
    %854 = vsyncpa [#allocation4], 1
    %855 = vsyncpa [#allocation13], 1

</llo_original>
